<compile_context>
chip_gen: v7x
topology: tpu7x:2x2x1
jax: 0.10.0
libtpu: 0.0.40
codegen_flags: <defaults>
</compile_context>

<pallas_src>
import functools

import jax
import jax.numpy as jnp
from jax.experimental import pallas as pl
from jax.experimental.pallas import tpu as pltpu

LANE = 128
_F32 = jnp.float32
_BF16 = jnp.bfloat16


def _round_up(x, m):
    return ((x + m - 1) // m) * m


def _row_tile(M, row_tile):
    """Row tile (multiple of 16 for bf16 sublane packing).  When the whole
    problem fits in <= 2 tiles, split into 2 balanced tiles so the 'parallel'
    row axis can shard across both TensorCores on v7x (costs nothing on
    single-TC v5e/v6e)."""
    if M <= 16:
        return 16
    if M <= 2 * row_tile:
        return min(row_tile, _round_up((M + 1) // 2, 16))
    return row_tile


def _vmem_limit(est_bytes):
    """Scoped-VMEM budget from the actual buffer sum + headroom, capped under
    v7x's 64 MiB physical VMEM (fine on v5e/v6e's 128 MiB)."""
    return min(max(int(est_bytes * 1.3) + (8 << 20), 32 << 20), 56 << 20)


# ----------------------------------------------------------------------------
# Kernel bodies
# ----------------------------------------------------------------------------
def _splayer_encoder_tile(x_ref, wsp_ref, bsp_ref, g_ref, be_ref, wenc_ref,
                          benc_ref, *, h_logical):
    """splayer (Linear+ReLU) followed by pre-LN FFN encoder block, one row tile.

    Feature axes are zero-padded to 128 lanes.  Padded columns of h are exactly
    zero (padded W columns / bias are zero, ReLU(0)=0), so LN statistics over
    the full padded axis divided by the logical d_model are exact; gamma/beta
    are zero on padded lanes, keeping them zero afterwards."""
    # splayer: ReLU(x @ Wsp + b)   (bf16 inputs, f32 MXU accumulation)
    h = jnp.dot(x_ref[...], wsp_ref[...], preferred_element_type=jnp.float32)
    h = jnp.maximum(h + bsp_ref[...], 0.0)                      # (tm, Hp) f32

    # encoder: x + ReLU(LayerNorm(x) @ Wenc + b)
    inv_h = jnp.float32(1.0 / h_logical)
    mu = jnp.sum(h, axis=-1, keepdims=True) * inv_h
    msq = jnp.sum(h * h, axis=-1, keepdims=True) * inv_h
    var = jnp.maximum(msq - mu * mu, 0.0)
    xn = (h - mu) * jax.lax.rsqrt(var + 1e-5)
    xn = xn * g_ref[...] + be_ref[...]                          # padded cols -> 0
    ff = jnp.dot(xn.astype(_BF16), wenc_ref[...],
                 preferred_element_type=jnp.float32)
    ff = jnp.maximum(ff + benc_ref[...], 0.0)
    return h + ff                                               # residual, f32


def _fused_logits_kernel(x_ref, wsp_ref, bsp_ref, g_ref, be_ref, wenc_ref,
                         benc_ref, wdec_ref, bdec_ref, o_ref, enc_scr,
                         *, h_logical):
    """Grid = (row_tiles, vocab_tiles); vocab is the inner ('arbitrary') axis.
    The encoded activation for row tile i is computed once (j == 0) into a
    bf16 VMEM scratch and reused (no re-cast) for every vocab tile j."""
    @pl.when(pl.program_id(1) == 0)
    def _():
        enc_scr[...] = _splayer_encoder_tile(
            x_ref, wsp_ref, bsp_ref, g_ref, be_ref, wenc_ref, benc_ref,
            h_logical=h_logical).astype(_BF16)

    logits = jnp.dot(enc_scr[...], wdec_ref[...],
                     preferred_element_type=jnp.float32) + bdec_ref[...]
    o_ref[...] = logits.astype(o_ref.dtype)


def _encoded_kernel(x_ref, wsp_ref, bsp_ref, g_ref, be_ref, wenc_ref,
                    benc_ref, o_ref, *, h_logical):
    o_ref[...] = _splayer_encoder_tile(
        x_ref, wsp_ref, bsp_ref, g_ref, be_ref, wenc_ref, benc_ref,
        h_logical=h_logical).astype(o_ref.dtype)


# ----------------------------------------------------------------------------
# pallas_call wrappers
# ----------------------------------------------------------------------------
def _call_fused_logits(x, p, h_logical, *, row_tile=512, vocab_tile=1024,
                       out_dtype=_BF16):
    M, K = x.shape
    Hp = p["w_sp"].shape[1]
    Vp = p["w_dec"].shape[1]

    tm = _row_tile(M, row_tile)
    Mp = _round_up(M, tm)
    if Mp != M:
        x = jnp.pad(x, ((0, Mp - M), (0, 0)))

    # Keep the vocab tile large; pad the vocab axis up to a tile multiple
    # instead of shrinking tn.  Padded logit columns are sliced off outside.
    tn = min(vocab_tile, Vp)
    Vpp = _round_up(Vp, tn)
    w_dec, b_dec = p["w_dec"], p["b_dec"]
    if Vpp != Vp:
        w_dec = jnp.pad(w_dec, ((0, 0), (0, Vpp - Vp)))
        b_dec = jnp.pad(b_dec, ((0, 0), (0, Vpp - Vp)))
    grid = (Mp // tm, Vpp // tn)

    out_bytes = jnp.dtype(out_dtype).itemsize
    est = (K * Hp * 2 + 4 * Hp * 4 + Hp * Hp * 2          # Buffered(1) constants
           + 2 * (tm * K * 2)                             # x tile (bf16) x2
           + 2 * (Hp * tn * 2 + tn * 4)                   # decoder W/b tiles x2
           + 2 * (tm * tn * out_bytes)                    # output tile x2
           + tm * Hp * 2)                                 # bf16 encoded scratch
    const = dict(pipeline_mode=pl.Buffered(1))            # single-buffer constants

    out = pl.pallas_call(
        functools.partial(_fused_logits_kernel, h_logical=h_logical),
        out_shape=jax.ShapeDtypeStruct((Mp, Vpp), out_dtype),
        grid_spec=pltpu.PrefetchScalarGridSpec(
            num_scalar_prefetch=0,
            grid=grid,
            in_specs=[
                pl.BlockSpec((tm, K), lambda i, j: (i, 0)),           # stacked feats
                pl.BlockSpec((K, Hp), lambda i, j: (0, 0), **const),  # splayer W
                pl.BlockSpec((1, Hp), lambda i, j: (0, 0), **const),  # splayer b
                pl.BlockSpec((1, Hp), lambda i, j: (0, 0), **const),  # LN gamma
                pl.BlockSpec((1, Hp), lambda i, j: (0, 0), **const),  # LN beta
                pl.BlockSpec((Hp, Hp), lambda i, j: (0, 0), **const), # encoder W
                pl.BlockSpec((1, Hp), lambda i, j: (0, 0), **const),  # encoder b
                # TODO(synk): sweep pl.Buffered(3) on decoder W if DMA is still
                # exposed between vocab tiles after the tile-size changes.
                pl.BlockSpec((Hp, tn), lambda i, j: (0, j)),          # decoder W
                pl.BlockSpec((1, tn), lambda i, j: (0, j)),           # decoder b
            ],
            out_specs=pl.BlockSpec((tm, tn), lambda i, j: (i, j)),
            scratch_shapes=[pltpu.VMEM((tm, Hp), _BF16)],             # encoded tile
        ),
        compiler_params=pltpu.CompilerParams(
            dimension_semantics=("parallel", "arbitrary"),
            vmem_limit_bytes=_vmem_limit(est),
        ),
    )(x, p["w_sp"], p["b_sp"], p["ln_g"], p["ln_b"],
      p["w_enc"], p["b_enc"], w_dec, b_dec)
    return out, M


def _call_encoded(x, p, h_logical, *, row_tile=512):
    M, K = x.shape
    Hp = p["w_sp"].shape[1]

    tm = _row_tile(M, row_tile)
    Mp = _round_up(M, tm)
    if Mp != M:
        x = jnp.pad(x, ((0, Mp - M), (0, 0)))
    grid = (Mp // tm,)

    est = (K * Hp * 2 + 4 * Hp * 4 + Hp * Hp * 2
           + 2 * (tm * K * 2) + 2 * (tm * Hp * 4))
    const = dict(pipeline_mode=pl.Buffered(1))

    out = pl.pallas_call(
        functools.partial(_encoded_kernel, h_logical=h_logical),
        out_shape=jax.ShapeDtypeStruct((Mp, Hp), _F32),
        grid_spec=pltpu.PrefetchScalarGridSpec(
            num_scalar_prefetch=0,
            grid=grid,
            in_specs=[
                pl.BlockSpec((tm, K), lambda i: (i, 0)),
                pl.BlockSpec((K, Hp), lambda i: (0, 0), **const),
                pl.BlockSpec((1, Hp), lambda i: (0, 0), **const),
                pl.BlockSpec((1, Hp), lambda i: (0, 0), **const),
                pl.BlockSpec((1, Hp), lambda i: (0, 0), **const),
                pl.BlockSpec((Hp, Hp), lambda i: (0, 0), **const),
                pl.BlockSpec((1, Hp), lambda i: (0, 0), **const),
            ],
            out_specs=pl.BlockSpec((tm, Hp), lambda i: (i, 0)),
        ),
        compiler_params=pltpu.CompilerParams(
            dimension_semantics=("parallel",),
            vmem_limit_bytes=_vmem_limit(est),
        ),
    )(x, p["w_sp"], p["b_sp"], p["ln_g"], p["ln_b"], p["w_enc"], p["b_enc"])
    return out, M


# ----------------------------------------------------------------------------
# Framework (mirrors the PyTorch container semantics)
# ----------------------------------------------------------------------------
def _xavier_uniform(key, shape):
    fan_in, fan_out = shape[0], shape[1]
    limit = (6.0 / (fan_in + fan_out)) ** 0.5
    return jax.random.uniform(key, shape, _F32, -limit, limit)


def _pad_to(a, shape):
    return jnp.pad(a, [(0, s - d) for d, s in zip(a.shape, shape)])


class Framework:
    def __init__(self, params, feat_dim, d_model, vocab_size):
        self.params = params
        self.feat_dim = feat_dim
        self.d_model = d_model
        self.vocab_size = vocab_size
        self._prepared, self._kp = self._prepare(params, feat_dim, d_model,
                                                 vocab_size)

    @staticmethod
    def _prepare(params, feat_dim, d_model, vocab_size):
        """Zero-pad feature axes (K, d_model, vocab) to lane width (128) and
        cast matmul weights to bf16.  Zero padding keeps padded lanes exactly
        zero through the whole splayer->encoder->decoder chain."""
        Kp = _round_up(2 * feat_dim, LANE)
        Hp = _round_up(d_model, LANE)
        Vp = _round_up(vocab_size, LANE)
        sp, en, de = params["splayer"], params["encoder"], params["decoder"]
        prepared = {
            "w_sp": _pad_to(sp["w"], (Kp, Hp)).astype(_BF16),
            "b_sp": _pad_to(sp["b"].reshape(1, -1), (1, Hp)),
            "ln_g": _pad_to(en["ln_g"].reshape(1, -1), (1, Hp)),
            "ln_b": _pad_to(en["ln_b"].reshape(1, -1), (1, Hp)),
            "w_enc": _pad_to(en["w"], (Hp, Hp)).astype(_BF16),
            "b_enc": _pad_to(en["b"].reshape(1, -1), (1, Hp)),
            "w_dec": _pad_to(de["w"], (Hp, Vp)).astype(_BF16),
            "b_dec": _pad_to(de["b"].reshape(1, -1), (1, Vp)),
        }
        return prepared, Kp

    @classmethod
    def create_model(cls, key, feat_dim, d_model, vocab_size):
        k1, k2, k3 = jax.random.split(key, 3)
        params = {
            "splayer": {
                "w": _xavier_uniform(k1, (2 * feat_dim, d_model)),  # dim>1 -> xavier
                "b": jnp.zeros((d_model,), _F32),
            },
            "encoder": {
                "ln_g": jnp.ones((d_model,), _F32),
                "ln_b": jnp.zeros((d_model,), _F32),
                "w": _xavier_uniform(k2, (d_model, d_model)),
                "b": jnp.zeros((d_model,), _F32),
            },
            "decoder": {
                "w": _xavier_uniform(k3, (d_model, vocab_size)),
                "b": jnp.zeros((vocab_size,), _F32),
            },
        }
        return cls(params, feat_dim, d_model, vocab_size)

    def _stack_frames(self, feats):
        """Frame stacking x2 (time subsampling).  A pure reshape of contiguous
        data; pairing stays inside each batch element because T is truncated to
        an even count first.  Columns are zero-padded to the lane-aligned K."""
        B, T, D = feats.shape
        T2 = T // 2
        x = feats[:, : 2 * T2, :].reshape(B * T2, 2 * D)
        if self._kp != 2 * D:
            x = jnp.pad(x, ((0, 0), (0, self._kp - 2 * D)))
        return x.astype(_BF16), B, T2

    def get_encoded(self, feats, len_feats):
        x, B, T2 = self._stack_frames(feats)
        out, M = _call_encoded(x, self._prepared, self.d_model)
        encoded = out[:M, : self.d_model].reshape(B, T2, self.d_model)
        return encoded, len_feats // 2

    def get_logits(self, feats, len_feats, logits_dtype=_BF16):
        # Fully fused splayer -> encoder -> decoder in a single pallas_call;
        # the encoded activation never round-trips through HBM.  Logits are
        # emitted in bf16 by default to halve output writeback traffic.
        x, B, T2 = self._stack_frames(feats)
        out, M = _call_fused_logits(x, self._prepared, self.d_model,
                                    out_dtype=logits_dtype)
        logits = out[:M, : self.vocab_size].reshape(B, T2, self.vocab_size)
        return logits, len_feats // 2

    # TODO(synk): forward / batch_beam_decode / package / restore are abstract
    # (raise NotImplementedError) in the reference module and are not translated.


# ----------------------------------------------------------------------------
if __name__ == "__main__":
    B, T, D = 2, 16, 8        # batch, time frames, feature dim
    H, V = 32, 48             # model dim, vocab size

    key = jax.random.PRNGKey(0)
    kp, kf = jax.random.split(key)

    model = Framework.create_model(kp, feat_dim=D, d_model=H, vocab_size=V)

    feats = jax.random.normal(kf, (B, T, D), _F32)
    len_feats = jnp.array([16, 12], jnp.int32)

    encoded, len_enc = model.get_encoded(feats, len_feats)
    logits, len_dec = model.get_logits(feats, len_feats)
    jax.block_until_ready((encoded, logits, len_enc, len_dec))

    assert encoded.shape == (B, T // 2, H), encoded.shape
    assert logits.shape == (B, T // 2, V), logits.shape
    assert len_dec.shape == (B,)
    assert bool(jnp.all(jnp.isfinite(logits.astype(jnp.float32))))
    print("KERNEL_OK")
</pallas_src>

<mosaic_0001>
module attributes {stable_mosaic.version = 11 : i64} {
  func.func @_encoded_kernel(%arg0: i32, %arg1: memref<16x128xbf16, #tpu.memory_space<vmem>>, %arg2: memref<128x128xbf16, #tpu.memory_space<vmem>>, %arg3: memref<1x128xf32, #tpu.memory_space<vmem>>, %arg4: memref<1x128xf32, #tpu.memory_space<vmem>>, %arg5: memref<1x128xf32, #tpu.memory_space<vmem>>, %arg6: memref<128x128xbf16, #tpu.memory_space<vmem>>, %arg7: memref<1x128xf32, #tpu.memory_space<vmem>>, %arg8: memref<16x128xf32, #tpu.memory_space<vmem>>) attributes {dimension_semantics = [#tpu.dimension_semantics<parallel>], iteration_bounds = array<i64: 1>, scalar_prefetch = 0 : i64, scratch_operands = 0 : i64, tpu.core_type = #tpu.core_type<tc>, window_params = [{transform_indices = @transform_0, window_bounds = array<i64: 16, 128>}, {pipeline_mode = #tpu.pipeline_mode<synchronous>, transform_indices = @transform_1, window_bounds = array<i64: 128, 128>}, {pipeline_mode = #tpu.pipeline_mode<synchronous>, transform_indices = @transform_2, window_bounds = array<i64: 1, 128>}, {pipeline_mode = #tpu.pipeline_mode<synchronous>, transform_indices = @transform_3, window_bounds = array<i64: 1, 128>}, {pipeline_mode = #tpu.pipeline_mode<synchronous>, transform_indices = @transform_4, window_bounds = array<i64: 1, 128>}, {pipeline_mode = #tpu.pipeline_mode<synchronous>, transform_indices = @transform_5, window_bounds = array<i64: 128, 128>}, {pipeline_mode = #tpu.pipeline_mode<synchronous>, transform_indices = @transform_6, window_bounds = array<i64: 1, 128>}, {transform_indices = @transform_7, window_bounds = array<i64: 16, 128>}]} {
    %c0 = arith.constant 0 : index
    %c0_0 = arith.constant 0 : index
    %0 = vector.load %arg1[%c0, %c0_0] : memref<16x128xbf16, #tpu.memory_space<vmem>>, vector<16x128xbf16>
    %c0_1 = arith.constant 0 : index
    %c0_2 = arith.constant 0 : index
    %1 = vector.load %arg2[%c0_1, %c0_2] : memref<128x128xbf16, #tpu.memory_space<vmem>>, vector<128x128xbf16>
    %cst = arith.constant dense<0.000000e+00> : vector<16x128xf32>
    %2 = tpu.matmul %0, %1, %cst {dimension_numbers = #tpu.dot_dimension_numbers<[1], [0], [0], [1], [0, 0, 1, 1], [], []>} : vector<16x128xbf16>, vector<128x128xbf16>, vector<16x128xf32> -> vector<16x128xf32>
    %c0_3 = arith.constant 0 : index
    %c0_4 = arith.constant 0 : index
    %3 = vector.load %arg3[%c0_3, %c0_4] : memref<1x128xf32, #tpu.memory_space<vmem>>, vector<1x128xf32>
    %4 = vector.broadcast %3 : vector<1x128xf32> to vector<16x128xf32>
    %5 = arith.addf %2, %4 : vector<16x128xf32>
    %cst_5 = arith.constant 0.000000e+00 : f32
    %6 = vector.broadcast %cst_5 : f32 to vector<16x128xf32>
    %7 = arith.maximumf %5, %6 : vector<16x128xf32>
    %cst_6 = arith.constant dense<0.000000e+00> : vector<16xf32>
    %8 = vector.multi_reduction <add>, %7, %cst_6 [1] : vector<16x128xf32> to vector<16xf32>
    %9 = vector.shape_cast %8 : vector<16xf32> to vector<16x1xf32>
    %cst_7 = arith.constant 3.125000e-02 : f32
    %10 = vector.broadcast %cst_7 : f32 to vector<16x1xf32>
    %11 = arith.mulf %9, %10 : vector<16x1xf32>
    %12 = arith.mulf %7, %7 : vector<16x128xf32>
    %cst_8 = arith.constant dense<0.000000e+00> : vector<16xf32>
    %13 = vector.multi_reduction <add>, %12, %cst_8 [1] : vector<16x128xf32> to vector<16xf32>
    %14 = vector.shape_cast %13 : vector<16xf32> to vector<16x1xf32>
    %cst_9 = arith.constant 3.125000e-02 : f32
    %15 = vector.broadcast %cst_9 : f32 to vector<16x1xf32>
    %16 = arith.mulf %14, %15 : vector<16x1xf32>
    %17 = arith.mulf %11, %11 : vector<16x1xf32>
    %18 = arith.subf %16, %17 : vector<16x1xf32>
    %cst_10 = arith.constant 0.000000e+00 : f32
    %19 = vector.broadcast %cst_10 : f32 to vector<16x1xf32>
    %20 = arith.maximumf %18, %19 : vector<16x1xf32>
    %21 = vector.broadcast %11 : vector<16x1xf32> to vector<16x128xf32>
    %22 = arith.subf %7, %21 : vector<16x128xf32>
    %cst_11 = arith.constant 9.99999974E-6 : f32
    %23 = vector.broadcast %cst_11 : f32 to vector<16x1xf32>
    %24 = arith.addf %20, %23 : vector<16x1xf32>
    %25 = math.rsqrt %24 : vector<16x1xf32>
    %26 = vector.broadcast %25 : vector<16x1xf32> to vector<16x128xf32>
    %27 = arith.mulf %22, %26 : vector<16x128xf32>
    %c0_12 = arith.constant 0 : index
    %c0_13 = arith.constant 0 : index
    %28 = vector.load %arg4[%c0_12, %c0_13] : memref<1x128xf32, #tpu.memory_space<vmem>>, vector<1x128xf32>
    %29 = vector.broadcast %28 : vector<1x128xf32> to vector<16x128xf32>
    %30 = arith.mulf %27, %29 : vector<16x128xf32>
    %c0_14 = arith.constant 0 : index
    %c0_15 = arith.constant 0 : index
    %31 = vector.load %arg5[%c0_14, %c0_15] : memref<1x128xf32, #tpu.memory_space<vmem>>, vector<1x128xf32>
    %32 = vector.broadcast %31 : vector<1x128xf32> to vector<16x128xf32>
    %33 = arith.addf %30, %32 : vector<16x128xf32>
    %34 = arith.truncf %33 : vector<16x128xf32> to vector<16x128xbf16>
    %c0_16 = arith.constant 0 : index
    %c0_17 = arith.constant 0 : index
    %35 = vector.load %arg6[%c0_16, %c0_17] : memref<128x128xbf16, #tpu.memory_space<vmem>>, vector<128x128xbf16>
    %cst_18 = arith.constant dense<0.000000e+00> : vector<16x128xf32>
    %36 = tpu.matmul %34, %35, %cst_18 {dimension_numbers = #tpu.dot_dimension_numbers<[1], [0], [0], [1], [0, 0, 1, 1], [], []>} : vector<16x128xbf16>, vector<128x128xbf16>, vector<16x128xf32> -> vector<16x128xf32>
    %c0_19 = arith.constant 0 : index
    %c0_20 = arith.constant 0 : index
    %37 = vector.load %arg7[%c0_19, %c0_20] : memref<1x128xf32, #tpu.memory_space<vmem>>, vector<1x128xf32>
    %38 = vector.broadcast %37 : vector<1x128xf32> to vector<16x128xf32>
    %39 = arith.addf %36, %38 : vector<16x128xf32>
    %cst_21 = arith.constant 0.000000e+00 : f32
    %40 = vector.broadcast %cst_21 : f32 to vector<16x128xf32>
    %41 = arith.maximumf %39, %40 : vector<16x128xf32>
    %42 = arith.addf %7, %41 : vector<16x128xf32>
    %c0_22 = arith.constant 0 : index
    %c0_23 = arith.constant 0 : index
    %43 = vector.load %arg8[%c0_22, %c0_23] : memref<16x128xf32, #tpu.memory_space<vmem>>, vector<16x128xf32>
    tpu.vector_store %arg8[%c0_22, %c0_23], %42 {strides = array<i32>} : memref<16x128xf32, #tpu.memory_space<vmem>>, vector<16x128xf32>,
    return
  }
  func.func @transform_0(%arg0: i32) -> (i32, i32) {
    %c0_i32 = arith.constant 0 : i32
    %c0_i32_0 = arith.constant 0 : i32
    return %arg0, %c0_i32 : i32, i32
  }
  func.func @transform_1(%arg0: i32) -> (i32, i32) {
    %c0_i32 = arith.constant 0 : i32
    %c0_i32_0 = arith.constant 0 : i32
    %c0_i32_1 = arith.constant 0 : i32
    return %c0_i32, %c0_i32_0 : i32, i32
  }
  func.func @transform_2(%arg0: i32) -> (i32, i32) {
    %c0_i32 = arith.constant 0 : i32
    %c0_i32_0 = arith.constant 0 : i32
    %c0_i32_1 = arith.constant 0 : i32
    return %c0_i32, %c0_i32_0 : i32, i32
  }
  func.func @transform_3(%arg0: i32) -> (i32, i32) {
    %c0_i32 = arith.constant 0 : i32
    %c0_i32_0 = arith.constant 0 : i32
    %c0_i32_1 = arith.constant 0 : i32
    return %c0_i32, %c0_i32_0 : i32, i32
  }
  func.func @transform_4(%arg0: i32) -> (i32, i32) {
    %c0_i32 = arith.constant 0 : i32
    %c0_i32_0 = arith.constant 0 : i32
    %c0_i32_1 = arith.constant 0 : i32
    return %c0_i32, %c0_i32_0 : i32, i32
  }
  func.func @transform_5(%arg0: i32) -> (i32, i32) {
    %c0_i32 = arith.constant 0 : i32
    %c0_i32_0 = arith.constant 0 : i32
    %c0_i32_1 = arith.constant 0 : i32
    return %c0_i32, %c0_i32_0 : i32, i32
  }
  func.func @transform_6(%arg0: i32) -> (i32, i32) {
    %c0_i32 = arith.constant 0 : i32
    %c0_i32_0 = arith.constant 0 : i32
    %c0_i32_1 = arith.constant 0 : i32
    return %c0_i32, %c0_i32_0 : i32, i32
  }
  func.func @transform_7(%arg0: i32) -> (i32, i32) {
    %c0_i32 = arith.constant 0 : i32
    %c0_i32_0 = arith.constant 0 : i32
    return %arg0, %c0_i32 : i32, i32
  }
}

</mosaic_0001>

<llo_original>
// kernel: tpu_custom_call.1
$region0: #{tpu_custom_call.1}
  #allocation0 [shape = 'u32[]', space=smem, size = 0x4, offset = 0x4, fixed_abs, tag = 'smem constant byte address 0x4 - core index']
  #allocation1 [shape = 'u32[144,128]{1,0:T(1,128)}', space=vmem, size = 0x12000, scoped, tag = 'internal scratch']
  %s0 = inlined_call_operand.hbm [shape: bf16[16,128], index: 0, kind: input, shape index: {}]
  %s1 = inlined_call_operand.hbm [shape: bf16[128,128], index: 1, kind: input, shape index: {}]
  %s2 = inlined_call_operand.vmem [shape: f32[1,128], index: 2, kind: input, shape index: {}]
  %s3 = inlined_call_operand.vmem [shape: f32[1,128], index: 3, kind: input, shape index: {}]
  %s4 = inlined_call_operand.vmem [shape: f32[1,128], index: 4, kind: input, shape index: {}]
  %s5 = inlined_call_operand.hbm [shape: bf16[128,128], index: 5, kind: input, shape index: {}]
  %s6 = inlined_call_operand.vmem [shape: f32[1,128], index: 6, kind: input, shape index: {}]
  %s7 = inlined_call_operand.hbm [shape: f32[16,128], index: 7, kind: output, shape index: {}]
  %s8 = sld [smem:[#allocation0]]
  $region50: #{tpu_custom_call.1} parent=0
    _
  %s10 = ssub.s32 1, %s8
  %s11 = scalar_select 0, %s10, %s8
  $region1: #{tpu_custom_call.1} parent=0
    #allocation2 [shape = 'u8[4096]{0}', space=vmem, size = 0x1000, scoped, tag = 'input window, operand 0, single buffered']
    #allocation3 [shape = 's32[1]{0}', space=sflag, size = 0x4, scoped, tag = 'scoped memory for tpu_custom_call.1']
    #allocation4 [shape = 's32[1]{0}', space=sflag, size = 0x4, scoped, tag = 'scoped memory for tpu_custom_call.1']
    #allocation5 [shape = 'u8[32768]{0}', space=vmem, size = 0x8000, scoped, tag = 'input window, operand 1, single buffered']
    #allocation6 [shape = 's32[1]{0}', space=sflag, size = 0x4, scoped, tag = 'scoped memory for tpu_custom_call.1']
    #allocation7 [shape = 'u8[32768]{0}', space=vmem, size = 0x8000, scoped, tag = 'input window, operand 5, single buffered']
    #allocation8 [shape = 'u8[8192]{0}', space=vmem, size = 0x2000, scoped, tag = 'output window, operand 0, single buffered']
    %12 = vsyncpa [#allocation3], 0
    %13 = vsyncpa [#allocation6], 0
    %14 = vsyncpa [#allocation4], 0
    // Predicated region
    $region2: #{tpu_custom_call.1} parent=1 // pred_check
      _
    $region3: #{tpu_custom_call.1} parent=1 // pred_check_branch
      %16 = sbr.rel (0) target = $region5
    $region4: #{tpu_custom_call.1} parent=1 // pred_region
      %s18 = ssub.s32 128, 128
      %19 = vsyncadd [#allocation3], %s18
      %s20 = sshll.u32 [#allocation2], 4
      %s21 = int_to_ptr.vmem [resolvable:$true] %s20
      %26 = dma.hbm_to_vmem [thread:$0]  %s0, 128, %s21, [#allocation3], 64, 64, 4
    $region5: #{tpu_custom_call.1} parent=1 // pred_fallthru
      _
    // Predicated region
    $region6: #{tpu_custom_call.1} parent=1 // pred_check
      _
    $region7: #{tpu_custom_call.1} parent=1 // pred_check_branch
      %28 = sbr.rel (0) target = $region9
    $region8: #{tpu_custom_call.1} parent=1 // pred_region
      %s30 = ssub.s32 1024, 1024
      %31 = vsyncadd [#allocation6], %s30
      %s32 = sshll.u32 [#allocation5], 4
      %s33 = int_to_ptr.vmem [resolvable:$true] %s32
      %38 = dma.hbm_to_vmem [thread:$0]  %s1, 1024, %s33, [#allocation6], 64, 64, 4
    $region9: #{tpu_custom_call.1} parent=1 // pred_fallthru
      _
    // Predicated region
    $region10: #{tpu_custom_call.1} parent=1 // pred_check
      _
    $region11: #{tpu_custom_call.1} parent=1 // pred_check_branch
      %40 = sbr.rel (0) target = $region13
    $region12: #{tpu_custom_call.1} parent=1 // pred_region
      _
    $region13: #{tpu_custom_call.1} parent=1 // pred_fallthru
      _
    // Predicated region
    $region14: #{tpu_custom_call.1} parent=1 // pred_check
      _
    $region15: #{tpu_custom_call.1} parent=1 // pred_check_branch
      %42 = sbr.rel (0) target = $region17
    $region16: #{tpu_custom_call.1} parent=1 // pred_region
      _
    $region17: #{tpu_custom_call.1} parent=1 // pred_fallthru
      _
    // Predicated region
    $region18: #{tpu_custom_call.1} parent=1 // pred_check
      _
    $region19: #{tpu_custom_call.1} parent=1 // pred_check_branch
      %44 = sbr.rel (0) target = $region21
    $region20: #{tpu_custom_call.1} parent=1 // pred_region
      _
    $region21: #{tpu_custom_call.1} parent=1 // pred_fallthru
      _
    // Predicated region
    $region22: #{tpu_custom_call.1} parent=1 // pred_check
      _
    $region23: #{tpu_custom_call.1} parent=1 // pred_check_branch
      %46 = sbr.rel (0) target = $region25
    $region24: #{tpu_custom_call.1} parent=1 // pred_region
      %s48 = ssub.s32 1024, 1024
      %49 = vsyncadd [#allocation6], %s48
      %s50 = sshll.u32 [#allocation7], 4
      %s51 = int_to_ptr.vmem [resolvable:$true] %s50
      %56 = dma.hbm_to_vmem [thread:$0]  %s5, 1024, %s51, [#allocation6], 64, 64, 4
    $region25: #{tpu_custom_call.1} parent=1 // pred_fallthru
      _
    // Predicated region
    $region26: #{tpu_custom_call.1} parent=1 // pred_check
      _
    $region27: #{tpu_custom_call.1} parent=1 // pred_check_branch
      %58 = sbr.rel (0) target = $region29
    $region28: #{tpu_custom_call.1} parent=1 // pred_region
      _
    $region29: #{tpu_custom_call.1} parent=1 // pred_fallthru
      _
    // Predicated region
    $region30: #{tpu_custom_call.1} parent=1 // pred_check
      _
    $region31: #{tpu_custom_call.1} parent=1 // pred_check_branch
      %60 = sbr.rel (0) target = $region33
    $region32: #{tpu_custom_call.1} parent=1 // pred_region
      %61 = dma.done [#allocation3], 128
    $region33: #{tpu_custom_call.1} parent=1 // pred_fallthru
      _
    // Predicated region
    $region34: #{tpu_custom_call.1} parent=1 // pred_check
      _
    $region35: #{tpu_custom_call.1} parent=1 // pred_check_branch
      %63 = sbr.rel (0) target = $region37
    $region36: #{tpu_custom_call.1} parent=1 // pred_region
      %64 = dma.done [#allocation6], 1024
    $region37: #{tpu_custom_call.1} parent=1 // pred_fallthru
      _
    // Predicated region
    $region38: #{tpu_custom_call.1} parent=1 // pred_check
      _
    $region39: #{tpu_custom_call.1} parent=1 // pred_check_branch
      %66 = sbr.rel (0) target = $region41
    $region40: #{tpu_custom_call.1} parent=1 // pred_region
      %67 = dma.done [#allocation6], 1024
    $region41: #{tpu_custom_call.1} parent=1 // pred_fallthru
      _
    %v69 = vld [vmem:[#allocation2] sm:$0xf]
    %v70 = vld [vmem:[#allocation2 + $0x4] sm:$0xf]
    %v71 = vld [vmem:[#allocation5] sm:$0xf]
    %v72 = vld [vmem:[#allocation5 + $0x4] sm:$0xf]
    %v73 = vld [vmem:[#allocation5 + $0x8] sm:$0xf]
    %v74 = vld [vmem:[#allocation5 + $0xc] sm:$0xf]
    %v75 = vld [vmem:[#allocation5 + $0x10] sm:$0xf]
    %v76 = vld [vmem:[#allocation5 + $0x14] sm:$0xf]
    %v77 = vld [vmem:[#allocation5 + $0x18] sm:$0xf]
    %v78 = vld [vmem:[#allocation5 + $0x1c] sm:$0xf]
    %v79 = vld [vmem:[#allocation5 + $0x20] sm:$0xf]
    %v80 = vld [vmem:[#allocation5 + $0x24] sm:$0xf]
    %v81 = vld [vmem:[#allocation5 + $0x28] sm:$0xf]
    %v82 = vld [vmem:[#allocation5 + $0x2c] sm:$0xf]
    %v83 = vld [vmem:[#allocation5 + $0x30] sm:$0xf]
    %v84 = vld [vmem:[#allocation5 + $0x34] sm:$0xf]
    %v85 = vld [vmem:[#allocation5 + $0x38] sm:$0xf]
    %v86 = vld [vmem:[#allocation5 + $0x3c] sm:$0xf]
    %v87 = vld [vmem:[%s2] sm:$0x1]
    %v89 = vlaneseq
    %v90 = vshrl.u32 %v89, 7
    %v91 = vsub.s32 0, %v90
    %v92 = vrot.slane %v87, %v91
    %v96 = vunpack.c.l.b16 %v69
    %v97 = vunpack.c.l.b16 %v70
    %v98 = vpack.c.b16 %v97, %v96
    %v116 = vunpack.c.l.b16 %v71
    %v117 = vunpack.c.l.b16 %v72
    %v118 = vunpack.c.l.b16 %v73
    %v119 = vunpack.c.l.b16 %v74
    %v120 = vunpack.c.l.b16 %v75
    %v121 = vunpack.c.l.b16 %v76
    %v122 = vunpack.c.l.b16 %v77
    %v123 = vunpack.c.l.b16 %v78
    %v124 = vunpack.c.l.b16 %v79
    %v125 = vunpack.c.l.b16 %v80
    %v126 = vunpack.c.l.b16 %v81
    %v127 = vunpack.c.l.b16 %v82
    %v128 = vunpack.c.l.b16 %v83
    %v129 = vunpack.c.l.b16 %v84
    %v130 = vunpack.c.l.b16 %v85
    %v131 = vunpack.c.l.b16 %v86
    %v132 = vpack.c.b16 %v117, %v116
    %v133 = vpack.c.b16 %v119, %v118
    %v134 = vpack.c.b16 %v121, %v120
    %v135 = vpack.c.b16 %v123, %v122
    %v136 = vpack.c.b16 %v125, %v124
    %v137 = vpack.c.b16 %v127, %v126
    %v138 = vpack.c.b16 %v129, %v128
    %v139 = vpack.c.b16 %v131, %v130
    %148 = vmatprep.subr.bf16.mxu0 0
    %149 = vmatpush1.bf16.msra.mxu0 %v132
    %150 = vmatprep.subr.bf16.mxu0 0
    %151 = vmatpush1.bf16.msra.mxu0 %v133
    %152 = vmatprep.subr.bf16.mxu0 0
    %153 = vmatpush1.bf16.msra.mxu0 %v134
    %154 = vmatprep.subr.bf16.mxu0 0
    %155 = vmatpush1.bf16.msra.mxu0 %v135
    %156 = vmatprep.subr.bf16.mxu0 0
    %157 = vmatpush1.bf16.msra.mxu0 %v136
    %158 = vmatprep.subr.bf16.mxu0 0
    %159 = vmatpush1.bf16.msra.mxu0 %v137
    %160 = vmatprep.subr.bf16.mxu0 0
    %161 = vmatpush1.bf16.msra.mxu0 %v138
    %162 = vmatprep.subr.bf16.mxu0 0
    %163 = vmatpush1.bf16.msra.mxu0 %v139
    %164 = vmatprep.subr.bf16.mxu0 0
    %165 = vmatpush1.bf16.msra.mxu0 0
    %166 = vmatprep.subr.bf16.mxu0 0
    %167 = vmatpush1.bf16.msra.mxu0 0
    %168 = vmatprep.subr.bf16.mxu0 0
    %169 = vmatpush1.bf16.msra.mxu0 0
    %170 = vmatprep.subr.bf16.mxu0 0
    %171 = vmatpush1.bf16.msra.mxu0 0
    %172 = vmatprep.subr.bf16.mxu0 0
    %173 = vmatpush1.bf16.msra.mxu0 0
    %174 = vmatprep.subr.bf16.mxu0 0
    %175 = vmatpush1.bf16.msra.mxu0 0
    %176 = vmatprep.subr.bf16.mxu0 0
    %177 = vmatpush1.bf16.msra.mxu0 0
    %178 = vmatprep.subr.bf16.mxu0 0
    %179 = vmatpush1.bf16.msra.mxu0 0
    %180 = vmatprep.mubr.bf16.mxu0 0
    %181 = vmatmul.mubr.bf16.gmra.mrb[0].mxu0 %v98
    %v182 = vpop.f32.mrb[0].mxu0
    %v183 = vadd.f32 %v92, %v182
    %v184 = vpop.f32.mrb[0].mxu0
    %v185 = vpop.f32.mrb[0].mxu0
    %v186 = vadd.f32 %v92, %v185
    %v187 = vpop.f32.mrb[0].mxu0
    %188 = vdwg.mxu0
    %v189 = vmax.f32 %v183, 0.0
    %v190 = vmax.f32 %v186, 0.0
    %191 = vadd.xlane.f32.xlu0 %v189
    %v192 = vpop.xlane.xlu0 %191
    %193 = vadd.xlane.f32.xlu0 %v190
    %v194 = vpop.xlane.xlu0 %193
    %v195 = vmul.f32 %v192, 0.03125
    %v196 = vmul.f32 %v194, 0.03125
    %v197 = vmul.f32 %v189, %v189
    %v198 = vmul.f32 %v190, %v190
    %199 = vadd.xlane.f32.xlu0 %v197
    %v200 = vpop.xlane.xlu0 %199
    %201 = vadd.xlane.f32.xlu0 %v198
    %v202 = vpop.xlane.xlu0 %201
    %v203 = vmul.f32 %v200, 0.03125
    %v204 = vmul.f32 %v202, 0.03125
    %v205 = vmul.f32 %v195, %v195
    %v206 = vmul.f32 %v196, %v196
    %v207 = vsub.f32 %v203, %v205
    %v208 = vsub.f32 %v204, %v206
    %v209 = vmax.f32 %v207, 0.0
    %v210 = vmax.f32 %v208, 0.0
    %v211 = vsub.f32 %v189, %v195
    %v212 = vsub.f32 %v190, %v196
    %v213 = vadd.f32 %v209, 1e-05
    %v214 = vadd.f32 %v210, 1e-05
    %v215 = vrsqrt.pop %v213
    %v216 = vrsqrt.pop %v214
    %v217 = vmul.f32 %v211, %v215
    %v218 = vmul.f32 %v212, %v216
    %v219 = vld [vmem:[%s3] sm:$0x1]
    %v221 = vlaneseq
    %v222 = vshrl.u32 %v221, 7
    %v223 = vsub.s32 0, %v222
    %v224 = vrot.slane %v219, %v223
    %v226 = vmul.f32 %v217, %v224
    %v227 = vmul.f32 %v218, %v224
    %v228 = vld [vmem:[%s4] sm:$0x1]
    %v230 = vlaneseq
    %v231 = vshrl.u32 %v230, 7
    %v232 = vsub.s32 0, %v231
    %v233 = vrot.slane %v228, %v232
    %v235 = vadd.f32 %v226, %v233
    %v236 = vadd.f32 %v227, %v233
    %v237 = vpack.c.bf16 %v236, %v235
    %v238 = vld [vmem:[#allocation7] sm:$0xf]
    %v239 = vld [vmem:[#allocation7 + $0x4] sm:$0xf]
    %v240 = vld [vmem:[#allocation7 + $0x8] sm:$0xf]
    %v241 = vld [vmem:[#allocation7 + $0xc] sm:$0xf]
    %v242 = vld [vmem:[#allocation7 + $0x10] sm:$0xf]
    %v243 = vld [vmem:[#allocation7 + $0x14] sm:$0xf]
    %v244 = vld [vmem:[#allocation7 + $0x18] sm:$0xf]
    %v245 = vld [vmem:[#allocation7 + $0x1c] sm:$0xf]
    %v246 = vld [vmem:[#allocation7 + $0x20] sm:$0xf]
    %v247 = vld [vmem:[#allocation7 + $0x24] sm:$0xf]
    %v248 = vld [vmem:[#allocation7 + $0x28] sm:$0xf]
    %v249 = vld [vmem:[#allocation7 + $0x2c] sm:$0xf]
    %v250 = vld [vmem:[#allocation7 + $0x30] sm:$0xf]
    %v251 = vld [vmem:[#allocation7 + $0x34] sm:$0xf]
    %v252 = vld [vmem:[#allocation7 + $0x38] sm:$0xf]
    %v253 = vld [vmem:[#allocation7 + $0x3c] sm:$0xf]
    %v254 = vld [vmem:[%s6] sm:$0x1]
    %v256 = vlaneseq
    %v257 = vshrl.u32 %v256, 7
    %v258 = vsub.s32 0, %v257
    %v259 = vrot.slane %v254, %v258
    %v277 = vunpack.c.l.b16 %v238
    %v278 = vunpack.c.l.b16 %v239
    %v279 = vunpack.c.l.b16 %v240
    %v280 = vunpack.c.l.b16 %v241
    %v281 = vunpack.c.l.b16 %v242
    %v282 = vunpack.c.l.b16 %v243
    %v283 = vunpack.c.l.b16 %v244
    %v284 = vunpack.c.l.b16 %v245
    %v285 = vunpack.c.l.b16 %v246
    %v286 = vunpack.c.l.b16 %v247
    %v287 = vunpack.c.l.b16 %v248
    %v288 = vunpack.c.l.b16 %v249
    %v289 = vunpack.c.l.b16 %v250
    %v290 = vunpack.c.l.b16 %v251
    %v291 = vunpack.c.l.b16 %v252
    %v292 = vunpack.c.l.b16 %v253
    %v293 = vpack.c.b16 %v278, %v277
    %v294 = vpack.c.b16 %v280, %v279
    %v295 = vpack.c.b16 %v282, %v281
    %v296 = vpack.c.b16 %v284, %v283
    %v297 = vpack.c.b16 %v286, %v285
    %v298 = vpack.c.b16 %v288, %v287
    %v299 = vpack.c.b16 %v290, %v289
    %v300 = vpack.c.b16 %v292, %v291
    %309 = vmatprep.subr.bf16.mxu0 0
    %310 = vmatpush1.bf16.msra.mxu0 %v293
    %311 = vmatprep.subr.bf16.mxu0 0
    %312 = vmatpush1.bf16.msra.mxu0 %v294
    %313 = vmatprep.subr.bf16.mxu0 0
    %314 = vmatpush1.bf16.msra.mxu0 %v295
    %315 = vmatprep.subr.bf16.mxu0 0
    %316 = vmatpush1.bf16.msra.mxu0 %v296
    %317 = vmatprep.subr.bf16.mxu0 0
    %318 = vmatpush1.bf16.msra.mxu0 %v297
    %319 = vmatprep.subr.bf16.mxu0 0
    %320 = vmatpush1.bf16.msra.mxu0 %v298
    %321 = vmatprep.subr.bf16.mxu0 0
    %322 = vmatpush1.bf16.msra.mxu0 %v299
    %323 = vmatprep.subr.bf16.mxu0 0
    %324 = vmatpush1.bf16.msra.mxu0 %v300
    %325 = vmatprep.subr.bf16.mxu0 0
    %326 = vmatpush1.bf16.msra.mxu0 0
    %327 = vmatprep.subr.bf16.mxu0 0
    %328 = vmatpush1.bf16.msra.mxu0 0
    %329 = vmatprep.subr.bf16.mxu0 0
    %330 = vmatpush1.bf16.msra.mxu0 0
    %331 = vmatprep.subr.bf16.mxu0 0
    %332 = vmatpush1.bf16.msra.mxu0 0
    %333 = vmatprep.subr.bf16.mxu0 0
    %334 = vmatpush1.bf16.msra.mxu0 0
    %335 = vmatprep.subr.bf16.mxu0 0
    %336 = vmatpush1.bf16.msra.mxu0 0
    %337 = vmatprep.subr.bf16.mxu0 0
    %338 = vmatpush1.bf16.msra.mxu0 0
    %339 = vmatprep.subr.bf16.mxu0 0
    %340 = vmatpush1.bf16.msra.mxu0 0
    %341 = vmatprep.mubr.bf16.mxu0 0
    %342 = vmatmul.mubr.bf16.gmra.mrb[0].mxu0 %v237
    %v343 = vpop.f32.mrb[0].mxu0
    %v344 = vadd.f32 %v259, %v343
    %v345 = vpop.f32.mrb[0].mxu0
    %v346 = vpop.f32.mrb[0].mxu0
    %v347 = vadd.f32 %v259, %v346
    %v348 = vpop.f32.mrb[0].mxu0
    %349 = vdwg.mxu0
    %v350 = vmax.f32 %v344, 0.0
    %v351 = vmax.f32 %v347, 0.0
    %v352 = vadd.f32 %v189, %v350
    %v353 = vadd.f32 %v190, %v351
    %354 = vst [vmem:[#allocation8] sm:$0xff] %v352
    %355 = vst [vmem:[#allocation8 + $0x8] sm:$0xff] %v353
    // Predicated region
    $region42: #{tpu_custom_call.1} parent=1 // pred_check
      _
    $region43: #{tpu_custom_call.1} parent=1 // pred_check_branch
      %357 = sbr.rel (0) target = $region45
    $region44: #{tpu_custom_call.1} parent=1 // pred_region
      %s359 = ssub.s32 256, 256
      %360 = vsyncadd [#allocation4], %s359
      %s361 = sshll.u32 [#allocation8], 4
      %s362 = int_to_ptr.vmem [resolvable:$true] %s361
      %367 = dma.vmem_to_hbm [thread:$0]  %s362, 256, %s7, [#allocation4], 128, 128, 8
    $region45: #{tpu_custom_call.1} parent=1 // pred_fallthru
      _
    // Predicated region
    $region46: #{tpu_custom_call.1} parent=1 // pred_check
      _
    $region47: #{tpu_custom_call.1} parent=1 // pred_check_branch
      %369 = sbr.rel (0) target = $region49
    $region48: #{tpu_custom_call.1} parent=1 // pred_region
      %370 = dma.done [#allocation4], 256
    $region49: #{tpu_custom_call.1} parent=1 // pred_fallthru
      _
    %371 = vsyncpa [#allocation3], 1
    %372 = vsyncpa [#allocation6], 1
    %373 = vsyncpa [#allocation4], 1

</llo_original>
